<compile_context>
chip_gen: v6e
topology: v6e:2x2x1
jax: 0.10.0
libtpu: 0.0.40
codegen_flags: <defaults>
</compile_context>

<pallas_src>
import functools

import jax
import jax.numpy as jnp
from jax.experimental import pallas as pl
from jax.experimental.pallas import tpu as pltpu

LANE = 128     # TPU lane width; hidden dim padded up to this for lane-dense stores
SUBLANE = 8    # TPU sublane width; node / graph counts padded up to this


def _round_up(x, m):
    return (x + m - 1) // m * m


# ----------------------------------------------------------------------------
# Pallas kernel: fully fused forward
#   h = relu(A @ (X @ W1) + b1)
#   h = relu(A @ (h @ W2) + b2)
#   h =       A @ (h @ W3) + b3
#   out = (P @ h) @ W_lin + b_lin          (mean-pool aggregated first)
# All operands are whole-array VMEM residents (problem is tiny); intermediates
# never leave the chip.
# ----------------------------------------------------------------------------
def _fused_gcn_forward_kernel(a_ref, p_ref, x_ref,
                              w1_ref, b1_ref, w2_ref, b2_ref,
                              w3_ref, b3_ref, wl_ref, bl_ref,
                              o_ref):
    a = a_ref[...]
    x = x_ref[...]

    # conv1 -> ReLU -> dropout(identity)
    h = jnp.dot(x, w1_ref[...], preferred_element_type=jnp.float32)
    h = jnp.dot(a, h, preferred_element_type=jnp.float32) + b1_ref[...]
    h = jnp.maximum(h, 0.0)

    # conv2 -> ReLU -> dropout(identity)
    h = jnp.dot(h, w2_ref[...], preferred_element_type=jnp.float32)
    h = jnp.dot(a, h, preferred_element_type=jnp.float32) + b2_ref[...]
    h = jnp.maximum(h, 0.0)

    # conv3
    h = jnp.dot(h, w3_ref[...], preferred_element_type=jnp.float32)
    h = jnp.dot(a, h, preferred_element_type=jnp.float32) + b3_ref[...]

    # global_mean_pool -> dropout(identity) -> Linear (aggregate first: G <= N)
    pooled = jnp.dot(p_ref[...], h, preferred_element_type=jnp.float32)
    out = jnp.dot(pooled, wl_ref[...], preferred_element_type=jnp.float32) + bl_ref[...]

    o_ref[...] = out


def fused_gcn_forward(a_hat, pool, x, params):
    """Single pallas_call for the whole GCN forward.

    a_hat: (Np, Np), pool: (Gp, Np), x: (Np, Hp) — all zero-padded to sublane/lane
    multiples; params are pre-padded (Hp, Hp) / (1, Hp).
    """
    gp = pool.shape[0]
    n_p = x.shape[0]
    hp = x.shape[1]

    # Advisory cost hint for the XLA scheduler around the custom call.
    flops = 2 * (3 * (n_p * hp * hp + n_p * n_p * hp) + gp * n_p * hp + gp * hp * hp)
    bytes_accessed = 4 * (a_hat.size + pool.size + x.size + 4 * hp * hp + 4 * hp + gp * hp)

    vmem = pl.BlockSpec(memory_space=pltpu.MemorySpace.VMEM)
    return pl.pallas_call(
        _fused_gcn_forward_kernel,
        out_shape=jax.ShapeDtypeStruct((gp, hp), jnp.float32),
        in_specs=[vmem] * 11,
        out_specs=vmem,
        compiler_params=pltpu.CompilerParams(vmem_limit_bytes=64 * 1024 * 1024),
        cost_estimate=pl.CostEstimate(flops=flops, transcendentals=0,
                                      bytes_accessed=bytes_accessed),
    )(a_hat, pool, x,
      params["w1"], params["b1"],
      params["w2"], params["b2"],
      params["w3"], params["b3"],
      params["lin_w"], params["lin_b"])


# ----------------------------------------------------------------------------
# Plain-JAX glue (runs inside the same jit region as the kernel launch):
# dense GCN-normalized adjacency and mean-pool operator, zero-padded so the
# kernel's operand shapes tile cleanly on (sublane, lane).
# TODO(synk): for large graphs, build A_hat rows in-kernel from a scalar-prefetched
# edge list instead of materializing the dense N x N operator.
# ----------------------------------------------------------------------------
def build_gcn_norm_adj(edge_index, num_nodes, num_nodes_padded):
    """D^{-1/2} (A + I) D^{-1/2}, matching torch_geometric GCNConv's gcn_norm.

    edge_index: (2, E) int32 with row 0 = source, row 1 = target.
    Returned matrix is (num_nodes_padded, num_nodes_padded); padding rows/cols are 0.
    """
    src, tgt = edge_index[0], edge_index[1]
    a = jnp.zeros((num_nodes_padded, num_nodes_padded), jnp.float32).at[tgt, src].add(1.0)
    eye = (jnp.arange(num_nodes_padded) < num_nodes).astype(jnp.float32)  # self loops, real nodes only
    a = a + jnp.diag(eye)
    deg = a.sum(axis=1)
    d_inv_sqrt = jnp.where(deg > 0.0, jax.lax.rsqrt(deg), 0.0)
    return d_inv_sqrt[:, None] * a * d_inv_sqrt[None, :]


def build_mean_pool(batch, num_graphs_padded, num_nodes_padded):
    """P (Gp, Np) with P[g, i] = 1/|graph g| if batch[i] == g, else 0 (padding rows/cols zero)."""
    n = batch.shape[0]
    batch_p = jnp.full((num_nodes_padded,), -1, jnp.int32).at[:n].set(batch)
    onehot = (batch_p[None, :] == jnp.arange(num_graphs_padded)[:, None]).astype(jnp.float32)
    counts = onehot.sum(axis=1, keepdims=True)
    return onehot / jnp.maximum(counts, 1.0)


# ----------------------------------------------------------------------------
# Parameters: everything is stored pre-padded (hidden -> LANE) and pre-cast to
# f32 at init so the forward pass does zero per-call casts / reshapes.
# Padding columns/rows are zero, so they are exactly inert through every layer.
# ----------------------------------------------------------------------------
def init_params(key, num_users, num_items, hidden):
    hp = _round_up(hidden, LANE)
    ks = jax.random.split(key, 8)
    s = 1.0 / jnp.sqrt(hidden)

    def pad_mat(m):      # (hidden, hidden) -> (hp, hp)
        return jnp.zeros((hp, hp), jnp.float32).at[:hidden, :hidden].set(m)

    def pad_bias(v):     # (hidden,) -> (1, hp)  (row vector, broadcast over nodes)
        return jnp.zeros((1, hp), jnp.float32).at[0, :hidden].set(v)

    def pad_emb(e):      # (n, hidden) -> (n, hp)
        return jnp.zeros((e.shape[0], hp), jnp.float32).at[:, :hidden].set(e)

    return {
        "user_embedding": pad_emb(jax.random.normal(ks[0], (num_users, hidden), jnp.float32)),
        "item_embedding": pad_emb(jax.random.normal(ks[1], (num_items, hidden), jnp.float32)),
        # GCNConv weights stored as (in, out) so the kernel does X @ W directly.
        "w1": pad_mat(jax.random.uniform(ks[2], (hidden, hidden), jnp.float32, -s, s)),
        "b1": pad_bias(jnp.zeros((hidden,), jnp.float32)),
        "w2": pad_mat(jax.random.uniform(ks[3], (hidden, hidden), jnp.float32, -s, s)),
        "b2": pad_bias(jnp.zeros((hidden,), jnp.float32)),
        "w3": pad_mat(jax.random.uniform(ks[4], (hidden, hidden), jnp.float32, -s, s)),
        "b3": pad_bias(jnp.zeros((hidden,), jnp.float32)),
        # final Linear(hidden, num_classes=hidden): stored as (in, out)
        "lin_w": pad_mat(jax.random.uniform(ks[5], (hidden, hidden), jnp.float32, -s, s)),
        "lin_b": pad_bias(jax.random.uniform(ks[6], (hidden,), jnp.float32, -s, s)),
    }


# ----------------------------------------------------------------------------
# Forward pass (single jit region: gathers + operator builds + one pallas_call)
# ----------------------------------------------------------------------------
@functools.partial(jax.jit, static_argnames=("num_graphs", "hidden"))
def gcn_recommender_forward(params, user_ids, item_ids, edge_index, batch,
                            num_graphs, hidden):
    # Embedding lookups (gather) — plain-JAX glue, already lane-padded.
    user_emb = jnp.take(params["user_embedding"], user_ids, axis=0)
    item_emb = jnp.take(params["item_embedding"], item_ids, axis=0)
    x = jnp.concatenate([user_emb, item_emb], axis=0)                 # (N, Hp)
    n = x.shape[0]

    n_p = _round_up(n, SUBLANE)
    g_p = _round_up(num_graphs, SUBLANE)

    # Zero-pad node rows so every kernel operand has sublane-aligned leading dims.
    x_p = jnp.zeros((n_p, x.shape[1]), jnp.float32).at[:n, :].set(x)  # (Np, Hp)
    a_hat = build_gcn_norm_adj(edge_index, n, n_p)                    # (Np, Np)
    pool = build_mean_pool(batch, g_p, n_p)                           # (Gp, Np)

    out_padded = fused_gcn_forward(a_hat, pool, x_p, params)          # (Gp, Hp)
    out = out_padded[:num_graphs, :hidden]                            # strip padding

    u = user_ids.shape[0]
    return out[:u], out[u:]                                           # matches PyTorch slicing


def predict(user_emb, item_emb):
    return (user_emb * item_emb).sum(axis=-1)


# ----------------------------------------------------------------------------
# Pure-JAX reference for correctness checking (same math, no Pallas, no padding)
# ----------------------------------------------------------------------------
def _reference_forward(params, user_ids, item_ids, edge_index, batch, num_graphs, hidden):
    ue = params["user_embedding"][user_ids][:, :hidden]
    ie = params["item_embedding"][item_ids][:, :hidden]
    x = jnp.concatenate([ue, ie], axis=0)
    n = x.shape[0]

    src, tgt = edge_index[0], edge_index[1]
    a = jnp.zeros((n, n), jnp.float32).at[tgt, src].add(1.0) + jnp.eye(n, dtype=jnp.float32)
    deg = a.sum(axis=1)
    dis = jnp.where(deg > 0.0, jax.lax.rsqrt(deg), 0.0)
    a = dis[:, None] * a * dis[None, :]

    onehot = (batch[None, :] == jnp.arange(num_graphs)[:, None]).astype(jnp.float32)
    p = onehot / jnp.maximum(onehot.sum(axis=1, keepdims=True), 1.0)

    w1 = params["w1"][:hidden, :hidden]; b1 = params["b1"][0, :hidden]
    w2 = params["w2"][:hidden, :hidden]; b2 = params["b2"][0, :hidden]
    w3 = params["w3"][:hidden, :hidden]; b3 = params["b3"][0, :hidden]
    wl = params["lin_w"][:hidden, :hidden]; bl = params["lin_b"][0, :hidden]
    h = jnp.maximum(a @ (x @ w1) + b1, 0.0)
    h = jnp.maximum(a @ (h @ w2) + b2, 0.0)
    h = a @ (h @ w3) + b3
    out = (p @ h) @ wl + bl
    u = user_ids.shape[0]
    return out[:u], out[u:]


# ----------------------------------------------------------------------------
if __name__ == "__main__":
    key = jax.random.PRNGKey(0)

    num_users, num_items, hidden = 5, 6, 32
    params = init_params(key, num_users, num_items, hidden)

    # 4 user nodes (graph nodes 0..3) and 4 item nodes (graph nodes 4..7).
    user_ids = jnp.array([0, 1, 2, 4], dtype=jnp.int32)
    item_ids = jnp.array([0, 2, 3, 5], dtype=jnp.int32)

    # Bipartite interaction edges (both directions), shape (2, E): [src; tgt].
    edge_index = jnp.array(
        [[0, 4, 1, 5, 2, 6, 3, 7, 0, 5],
         [4, 0, 5, 1, 6, 2, 7, 3, 5, 0]], dtype=jnp.int32)

    # Each node is its own graph so pooled output has 8 rows,
    # which the module then splits back into user / item halves.
    batch = jnp.arange(8, dtype=jnp.int32)
    num_graphs = 8

    user_out, item_out = gcn_recommender_forward(
        params, user_ids, item_ids, edge_index, batch, num_graphs, hidden)
    jax.block_until_ready((user_out, item_out))

    assert user_out.shape == (4, hidden) and item_out.shape == (4, hidden)

    # Correctness check against the pure-JAX reference.
    ref_u, ref_i = _reference_forward(
        params, user_ids, item_ids, edge_index, batch, num_graphs, hidden)
    assert jnp.allclose(user_out, ref_u, atol=1e-4, rtol=1e-4)
    assert jnp.allclose(item_out, ref_i, atol=1e-4, rtol=1e-4)

    scores = jax.block_until_ready(predict(user_out, item_out))
    assert scores.shape == (4,)

    print("KERNEL_OK")
</pallas_src>

<mosaic_0001>
module attributes {stable_mosaic.version = 11 : i64} {
  func.func @_fused_gcn_forward_kernel(%arg0: memref<8x8xf32, #tpu.memory_space<vmem>>, %arg1: memref<8x8xf32, #tpu.memory_space<vmem>>, %arg2: memref<8x128xf32, #tpu.memory_space<vmem>>, %arg3: memref<128x128xf32, #tpu.memory_space<vmem>>, %arg4: memref<1x128xf32, #tpu.memory_space<vmem>>, %arg5: memref<128x128xf32, #tpu.memory_space<vmem>>, %arg6: memref<1x128xf32, #tpu.memory_space<vmem>>, %arg7: memref<128x128xf32, #tpu.memory_space<vmem>>, %arg8: memref<1x128xf32, #tpu.memory_space<vmem>>, %arg9: memref<128x128xf32, #tpu.memory_space<vmem>>, %arg10: memref<1x128xf32, #tpu.memory_space<vmem>>, %arg11: memref<8x128xf32, #tpu.memory_space<vmem>>) attributes {dimension_semantics = [], scalar_prefetch = 0 : i64, scratch_operands = 0 : i64, tpu.core_type = #tpu.core_type<tc>} {
    %c0 = arith.constant 0 : index
    %c0_0 = arith.constant 0 : index
    %0 = vector.load %arg0[%c0, %c0_0] : memref<8x8xf32, #tpu.memory_space<vmem>>, vector<8x8xf32>
    %c0_1 = arith.constant 0 : index
    %c0_2 = arith.constant 0 : index
    %1 = vector.load %arg2[%c0_1, %c0_2] : memref<8x128xf32, #tpu.memory_space<vmem>>, vector<8x128xf32>
    %c0_3 = arith.constant 0 : index
    %c0_4 = arith.constant 0 : index
    %2 = vector.load %arg3[%c0_3, %c0_4] : memref<128x128xf32, #tpu.memory_space<vmem>>, vector<128x128xf32>
    %cst = arith.constant dense<0.000000e+00> : vector<8x128xf32>
    %3 = tpu.matmul %1, %2, %cst {dimension_numbers = #tpu.dot_dimension_numbers<[1], [0], [0], [1], [0, 0, 1, 1], [], []>} : vector<8x128xf32>, vector<128x128xf32>, vector<8x128xf32> -> vector<8x128xf32>
    %cst_5 = arith.constant dense<0.000000e+00> : vector<8x128xf32>
    %4 = tpu.matmul %0, %3, %cst_5 {dimension_numbers = #tpu.dot_dimension_numbers<[1], [0], [0], [1], [0, 0, 1, 1], [], []>} : vector<8x8xf32>, vector<8x128xf32>, vector<8x128xf32> -> vector<8x128xf32>
    %c0_6 = arith.constant 0 : index
    %c0_7 = arith.constant 0 : index
    %5 = vector.load %arg4[%c0_6, %c0_7] : memref<1x128xf32, #tpu.memory_space<vmem>>, vector<1x128xf32>
    %6 = vector.broadcast %5 : vector<1x128xf32> to vector<8x128xf32>
    %7 = arith.addf %4, %6 : vector<8x128xf32>
    %cst_8 = arith.constant 0.000000e+00 : f32
    %8 = vector.broadcast %cst_8 : f32 to vector<8x128xf32>
    %9 = arith.maximumf %7, %8 : vector<8x128xf32>
    %c0_9 = arith.constant 0 : index
    %c0_10 = arith.constant 0 : index
    %10 = vector.load %arg5[%c0_9, %c0_10] : memref<128x128xf32, #tpu.memory_space<vmem>>, vector<128x128xf32>
    %cst_11 = arith.constant dense<0.000000e+00> : vector<8x128xf32>
    %11 = tpu.matmul %9, %10, %cst_11 {dimension_numbers = #tpu.dot_dimension_numbers<[1], [0], [0], [1], [0, 0, 1, 1], [], []>} : vector<8x128xf32>, vector<128x128xf32>, vector<8x128xf32> -> vector<8x128xf32>
    %cst_12 = arith.constant dense<0.000000e+00> : vector<8x128xf32>
    %12 = tpu.matmul %0, %11, %cst_12 {dimension_numbers = #tpu.dot_dimension_numbers<[1], [0], [0], [1], [0, 0, 1, 1], [], []>} : vector<8x8xf32>, vector<8x128xf32>, vector<8x128xf32> -> vector<8x128xf32>
    %c0_13 = arith.constant 0 : index
    %c0_14 = arith.constant 0 : index
    %13 = vector.load %arg6[%c0_13, %c0_14] : memref<1x128xf32, #tpu.memory_space<vmem>>, vector<1x128xf32>
    %14 = vector.broadcast %13 : vector<1x128xf32> to vector<8x128xf32>
    %15 = arith.addf %12, %14 : vector<8x128xf32>
    %cst_15 = arith.constant 0.000000e+00 : f32
    %16 = vector.broadcast %cst_15 : f32 to vector<8x128xf32>
    %17 = arith.maximumf %15, %16 : vector<8x128xf32>
    %c0_16 = arith.constant 0 : index
    %c0_17 = arith.constant 0 : index
    %18 = vector.load %arg7[%c0_16, %c0_17] : memref<128x128xf32, #tpu.memory_space<vmem>>, vector<128x128xf32>
    %cst_18 = arith.constant dense<0.000000e+00> : vector<8x128xf32>
    %19 = tpu.matmul %17, %18, %cst_18 {dimension_numbers = #tpu.dot_dimension_numbers<[1], [0], [0], [1], [0, 0, 1, 1], [], []>} : vector<8x128xf32>, vector<128x128xf32>, vector<8x128xf32> -> vector<8x128xf32>
    %cst_19 = arith.constant dense<0.000000e+00> : vector<8x128xf32>
    %20 = tpu.matmul %0, %19, %cst_19 {dimension_numbers = #tpu.dot_dimension_numbers<[1], [0], [0], [1], [0, 0, 1, 1], [], []>} : vector<8x8xf32>, vector<8x128xf32>, vector<8x128xf32> -> vector<8x128xf32>
    %c0_20 = arith.constant 0 : index
    %c0_21 = arith.constant 0 : index
    %21 = vector.load %arg8[%c0_20, %c0_21] : memref<1x128xf32, #tpu.memory_space<vmem>>, vector<1x128xf32>
    %22 = vector.broadcast %21 : vector<1x128xf32> to vector<8x128xf32>
    %23 = arith.addf %20, %22 : vector<8x128xf32>
    %c0_22 = arith.constant 0 : index
    %c0_23 = arith.constant 0 : index
    %24 = vector.load %arg1[%c0_22, %c0_23] : memref<8x8xf32, #tpu.memory_space<vmem>>, vector<8x8xf32>
    %cst_24 = arith.constant dense<0.000000e+00> : vector<8x128xf32>
    %25 = tpu.matmul %24, %23, %cst_24 {dimension_numbers = #tpu.dot_dimension_numbers<[1], [0], [0], [1], [0, 0, 1, 1], [], []>} : vector<8x8xf32>, vector<8x128xf32>, vector<8x128xf32> -> vector<8x128xf32>
    %c0_25 = arith.constant 0 : index
    %c0_26 = arith.constant 0 : index
    %26 = vector.load %arg9[%c0_25, %c0_26] : memref<128x128xf32, #tpu.memory_space<vmem>>, vector<128x128xf32>
    %cst_27 = arith.constant dense<0.000000e+00> : vector<8x128xf32>
    %27 = tpu.matmul %25, %26, %cst_27 {dimension_numbers = #tpu.dot_dimension_numbers<[1], [0], [0], [1], [0, 0, 1, 1], [], []>} : vector<8x128xf32>, vector<128x128xf32>, vector<8x128xf32> -> vector<8x128xf32>
    %c0_28 = arith.constant 0 : index
    %c0_29 = arith.constant 0 : index
    %28 = vector.load %arg10[%c0_28, %c0_29] : memref<1x128xf32, #tpu.memory_space<vmem>>, vector<1x128xf32>
    %29 = vector.broadcast %28 : vector<1x128xf32> to vector<8x128xf32>
    %30 = arith.addf %27, %29 : vector<8x128xf32>
    %c0_30 = arith.constant 0 : index
    %c0_31 = arith.constant 0 : index
    %31 = vector.load %arg11[%c0_30, %c0_31] : memref<8x128xf32, #tpu.memory_space<vmem>>, vector<8x128xf32>
    tpu.vector_store %arg11[%c0_30, %c0_31], %30 {strides = array<i32>} : memref<8x128xf32, #tpu.memory_space<vmem>>, vector<8x128xf32>,
    return
  }
}

</mosaic_0001>

<llo_original>
// kernel: gcn_recommender_forward.1
$region0: #{gcn_recommender_forward.1}
  #allocation0 [shape = 'u32[]', space=smem, size = 0x4, offset = 0x4, fixed_abs, tag = 'smem constant byte address 0x4 - core index']
  #allocation1 [shape = 'u32[144,128]{1,0:T(1,128)}', space=vmem, size = 0x12000, scoped, tag = 'internal scratch']
  %s0 = inlined_call_operand.vmem [shape: f32[8,8], index: 0, kind: input, shape index: {}]
  %s1 = inlined_call_operand.vmem [shape: f32[8,8], index: 1, kind: input, shape index: {}]
  %s2 = inlined_call_operand.vmem [shape: f32[8,128], index: 2, kind: input, shape index: {}]
  %s3 = inlined_call_operand.vmem [shape: f32[128,128], index: 3, kind: input, shape index: {}]
  %s4 = inlined_call_operand.vmem [shape: f32[1,128], index: 4, kind: input, shape index: {}]
  %s5 = inlined_call_operand.vmem [shape: f32[128,128], index: 5, kind: input, shape index: {}]
  %s6 = inlined_call_operand.vmem [shape: f32[1,128], index: 6, kind: input, shape index: {}]
  %s7 = inlined_call_operand.vmem [shape: f32[128,128], index: 7, kind: input, shape index: {}]
  %s8 = inlined_call_operand.vmem [shape: f32[1,128], index: 8, kind: input, shape index: {}]
  %s9 = inlined_call_operand.vmem [shape: f32[128,128], index: 9, kind: input, shape index: {}]
  %s10 = inlined_call_operand.vmem [shape: f32[1,128], index: 10, kind: input, shape index: {}]
  %s11 = inlined_call_operand.vmem [shape: f32[8,128], index: 11, kind: output, shape index: {}]
  %s12 = sld [smem:[#allocation0]]
  $region54: #{gcn_recommender_forward.1} parent=0
    _
  %s14 = ssub.s32 1, %s12
  %s15 = scalar_select 0, %s14, %s12
  // Predicated region
  $region2: #{gcn_recommender_forward.1} parent=0 // pred_check
    _
  $region3: #{gcn_recommender_forward.1} parent=0 // pred_check_branch
    %17 = sbr.rel (0) target = $region5
  $region4: #{gcn_recommender_forward.1} parent=0 // pred_region
    _
  $region5: #{gcn_recommender_forward.1} parent=0 // pred_fallthru
    _
  // Predicated region
  $region6: #{gcn_recommender_forward.1} parent=0 // pred_check
    _
  $region7: #{gcn_recommender_forward.1} parent=0 // pred_check_branch
    %19 = sbr.rel (0) target = $region9
  $region8: #{gcn_recommender_forward.1} parent=0 // pred_region
    _
  $region9: #{gcn_recommender_forward.1} parent=0 // pred_fallthru
    _
  // Predicated region
  $region10: #{gcn_recommender_forward.1} parent=0 // pred_check
    _
  $region11: #{gcn_recommender_forward.1} parent=0 // pred_check_branch
    %21 = sbr.rel (0) target = $region13
  $region12: #{gcn_recommender_forward.1} parent=0 // pred_region
    _
  $region13: #{gcn_recommender_forward.1} parent=0 // pred_fallthru
    _
  // Predicated region
  $region14: #{gcn_recommender_forward.1} parent=0 // pred_check
    _
  $region15: #{gcn_recommender_forward.1} parent=0 // pred_check_branch
    %23 = sbr.rel (0) target = $region17
  $region16: #{gcn_recommender_forward.1} parent=0 // pred_region
    _
  $region17: #{gcn_recommender_forward.1} parent=0 // pred_fallthru
    _
  // Predicated region
  $region18: #{gcn_recommender_forward.1} parent=0 // pred_check
    _
  $region19: #{gcn_recommender_forward.1} parent=0 // pred_check_branch
    %25 = sbr.rel (0) target = $region21
  $region20: #{gcn_recommender_forward.1} parent=0 // pred_region
    _
  $region21: #{gcn_recommender_forward.1} parent=0 // pred_fallthru
    _
  // Predicated region
  $region22: #{gcn_recommender_forward.1} parent=0 // pred_check
    _
  $region23: #{gcn_recommender_forward.1} parent=0 // pred_check_branch
    %27 = sbr.rel (0) target = $region25
  $region24: #{gcn_recommender_forward.1} parent=0 // pred_region
    _
  $region25: #{gcn_recommender_forward.1} parent=0 // pred_fallthru
    _
  // Predicated region
  $region26: #{gcn_recommender_forward.1} parent=0 // pred_check
    _
  $region27: #{gcn_recommender_forward.1} parent=0 // pred_check_branch
    %29 = sbr.rel (0) target = $region29
  $region28: #{gcn_recommender_forward.1} parent=0 // pred_region
    _
  $region29: #{gcn_recommender_forward.1} parent=0 // pred_fallthru
    _
  // Predicated region
  $region30: #{gcn_recommender_forward.1} parent=0 // pred_check
    _
  $region31: #{gcn_recommender_forward.1} parent=0 // pred_check_branch
    %31 = sbr.rel (0) target = $region33
  $region32: #{gcn_recommender_forward.1} parent=0 // pred_region
    _
  $region33: #{gcn_recommender_forward.1} parent=0 // pred_fallthru
    _
  // Predicated region
  $region34: #{gcn_recommender_forward.1} parent=0 // pred_check
    _
  $region35: #{gcn_recommender_forward.1} parent=0 // pred_check_branch
    %33 = sbr.rel (0) target = $region37
  $region36: #{gcn_recommender_forward.1} parent=0 // pred_region
    _
  $region37: #{gcn_recommender_forward.1} parent=0 // pred_fallthru
    _
  // Predicated region
  $region38: #{gcn_recommender_forward.1} parent=0 // pred_check
    _
  $region39: #{gcn_recommender_forward.1} parent=0 // pred_check_branch
    %35 = sbr.rel (0) target = $region41
  $region40: #{gcn_recommender_forward.1} parent=0 // pred_region
    _
  $region41: #{gcn_recommender_forward.1} parent=0 // pred_fallthru
    _
  // Predicated region
  $region42: #{gcn_recommender_forward.1} parent=0 // pred_check
    _
  $region43: #{gcn_recommender_forward.1} parent=0 // pred_check_branch
    %37 = sbr.rel (0) target = $region45
  $region44: #{gcn_recommender_forward.1} parent=0 // pred_region
    _
  $region45: #{gcn_recommender_forward.1} parent=0 // pred_fallthru
    _
  %v38 = vld [vmem:[%s0] sm:$0xff]
  %v39 = vld [vmem:[%s2] sm:$0xff]
  %v40 = vld [vmem:[%s3] sm:$0xff]
  %v41 = vld [vmem:[%s3 + $0x8] sm:$0xff]
  %v42 = vld [vmem:[%s3 + $0x10] sm:$0xff]
  %v43 = vld [vmem:[%s3 + $0x18] sm:$0xff]
  %v44 = vld [vmem:[%s3 + $0x20] sm:$0xff]
  %v45 = vld [vmem:[%s3 + $0x28] sm:$0xff]
  %v46 = vld [vmem:[%s3 + $0x30] sm:$0xff]
  %v47 = vld [vmem:[%s3 + $0x38] sm:$0xff]
  %v48 = vld [vmem:[%s3 + $0x40] sm:$0xff]
  %v49 = vld [vmem:[%s3 + $0x48] sm:$0xff]
  %v50 = vld [vmem:[%s3 + $0x50] sm:$0xff]
  %v51 = vld [vmem:[%s3 + $0x58] sm:$0xff]
  %v52 = vld [vmem:[%s3 + $0x60] sm:$0xff]
  %v53 = vld [vmem:[%s3 + $0x68] sm:$0xff]
  %v54 = vld [vmem:[%s3 + $0x70] sm:$0xff]
  %v55 = vld [vmem:[%s3 + $0x78] sm:$0xff]
  %56 = vmatprep.subr.mxu0 0.0
  %57 = vmatpush1.msra.mxu0 %v55
  %58 = vmatprep.subr.mxu0 0.0
  %59 = vmatpush1.msra.mxu0 %v54
  %60 = vmatprep.subr.mxu0 0.0
  %61 = vmatpush1.msra.mxu0 %v53
  %62 = vmatprep.subr.mxu0 0.0
  %63 = vmatpush1.msra.mxu0 %v52
  %64 = vmatprep.subr.mxu0 0.0
  %65 = vmatpush1.msra.mxu0 %v51
  %66 = vmatprep.subr.mxu0 0.0
  %67 = vmatpush1.msra.mxu0 %v50
  %68 = vmatprep.subr.mxu0 0.0
  %69 = vmatpush1.msra.mxu0 %v49
  %70 = vmatprep.subr.mxu0 0.0
  %71 = vmatpush1.msra.mxu0 %v48
  %72 = vmatprep.subr.mxu0 0.0
  %73 = vmatpush1.msra.mxu0 %v47
  %74 = vmatprep.subr.mxu0 0.0
  %75 = vmatpush1.msra.mxu0 %v46
  %76 = vmatprep.subr.mxu0 0.0
  %77 = vmatpush1.msra.mxu0 %v45
  %78 = vmatprep.subr.mxu0 0.0
  %79 = vmatpush1.msra.mxu0 %v44
  %80 = vmatprep.subr.mxu0 0.0
  %81 = vmatpush1.msra.mxu0 %v43
  %82 = vmatprep.subr.mxu0 0.0
  %83 = vmatpush1.msra.mxu0 %v42
  %84 = vmatprep.subr.mxu0 0.0
  %85 = vmatpush1.msra.mxu0 %v41
  %86 = vmatprep.subr.mxu0 0.0
  %87 = vmatpush1.msra.mxu0 %v40
  %88 = vmatprep.subr.mxu0 0.0
  %89 = vmatpush2.msra.mxu0 0.0
  %90 = vmatprep.subr.mxu0 0.0
  %91 = vmatpush2.msra.mxu0 0.0
  %92 = vmatprep.subr.mxu0 0.0
  %93 = vmatpush2.msra.mxu0 0.0
  %94 = vmatprep.subr.mxu0 0.0
  %95 = vmatpush2.msra.mxu0 0.0
  %96 = vmatprep.subr.mxu0 0.0
  %97 = vmatpush2.msra.mxu0 0.0
  %98 = vmatprep.subr.mxu0 0.0
  %99 = vmatpush2.msra.mxu0 0.0
  %100 = vmatprep.subr.mxu0 0.0
  %101 = vmatpush2.msra.mxu0 0.0
  %102 = vmatprep.subr.mxu0 0.0
  %103 = vmatpush2.msra.mxu0 0.0
  %104 = vmatprep.subr.mxu0 0.0
  %105 = vmatpush2.msra.mxu0 0.0
  %106 = vmatprep.subr.mxu0 0.0
  %107 = vmatpush2.msra.mxu0 0.0
  %108 = vmatprep.subr.mxu0 0.0
  %109 = vmatpush2.msra.mxu0 0.0
  %110 = vmatprep.subr.mxu0 0.0
  %111 = vmatpush2.msra.mxu0 0.0
  %112 = vmatprep.subr.mxu0 0.0
  %113 = vmatpush2.msra.mxu0 0.0
  %114 = vmatprep.subr.mxu0 0.0
  %115 = vmatpush2.msra.mxu0 0.0
  %116 = vmatprep.subr.mxu0 0.0
  %117 = vmatpush2.msra.mxu0 0.0
  %118 = vmatprep.subr.mxu0 0.0
  %119 = vmatpush2.msra.mxu0 0.0
  %120 = vmatprep.mubr.f32.mxu0 0.0
  %121 = vmatmul.mubr.f32.gmra.mxu0 %v39
  %v122 = vpop.f32.mrf.mxu0
  %v123 = vadd.f32 0.0, %v122
  %v124 = vpop.f32.mrf.mxu0
  %125 = vdwg.mxu0
  %v126 = vld [vmem:[%s4] sm:$0x1]
  %v128 = vlaneseq
  %v129 = vshrl.u32 %v128, 7
  %v130 = vsub.s32 0, %v129
  %v131 = vrot.slane %v126, %v130
  %vm133 = vcmask 64512
  %v135 = vsel %vm133, %v38, 0
  %137 = vmatprep.subr.mxu0 0.0
  %138 = vmatpush1.msra.mxu0 0.0
  %139 = vmatprep.subr.mxu0 0.0
  %140 = vmatpush1.msra.mxu0 0.0
  %141 = vmatprep.subr.mxu0 0.0
  %142 = vmatpush1.msra.mxu0 0.0
  %143 = vmatprep.subr.mxu0 0.0
  %144 = vmatpush1.msra.mxu0 0.0
  %145 = vmatprep.subr.mxu0 0.0
  %146 = vmatpush1.msra.mxu0 0.0
  %147 = vmatprep.subr.mxu0 0.0
  %148 = vmatpush1.msra.mxu0 0.0
  %149 = vmatprep.subr.mxu0 0.0
  %150 = vmatpush1.msra.mxu0 0.0
  %151 = vmatprep.subr.mxu0 0.0
  %152 = vmatpush1.msra.mxu0 0.0
  %153 = vmatprep.subr.mxu0 0.0
  %154 = vmatpush1.msra.mxu0 0.0
  %155 = vmatprep.subr.mxu0 0.0
  %156 = vmatpush1.msra.mxu0 0.0
  %157 = vmatprep.subr.mxu0 0.0
  %158 = vmatpush1.msra.mxu0 0.0
  %159 = vmatprep.subr.mxu0 0.0
  %160 = vmatpush1.msra.mxu0 0.0
  %161 = vmatprep.subr.mxu0 0.0
  %162 = vmatpush1.msra.mxu0 0.0
  %163 = vmatprep.subr.mxu0 0.0
  %164 = vmatpush1.msra.mxu0 0.0
  %165 = vmatprep.subr.mxu0 0.0
  %166 = vmatpush1.msra.mxu0 0.0
  %167 = vmatprep.subr.mxu0 0.0
  %168 = vmatpush1.msra.mxu0 %v123
  %169 = vmatprep.subr.mxu0 0.0
  %170 = vmatpush2.msra.mxu0 0.0
  %171 = vmatprep.subr.mxu0 0.0
  %172 = vmatpush2.msra.mxu0 0.0
  %173 = vmatprep.subr.mxu0 0.0
  %174 = vmatpush2.msra.mxu0 0.0
  %175 = vmatprep.subr.mxu0 0.0
  %176 = vmatpush2.msra.mxu0 0.0
  %177 = vmatprep.subr.mxu0 0.0
  %178 = vmatpush2.msra.mxu0 0.0
  %179 = vmatprep.subr.mxu0 0.0
  %180 = vmatpush2.msra.mxu0 0.0
  %181 = vmatprep.subr.mxu0 0.0
  %182 = vmatpush2.msra.mxu0 0.0
  %183 = vmatprep.subr.mxu0 0.0
  %184 = vmatpush2.msra.mxu0 0.0
  %185 = vmatprep.subr.mxu0 0.0
  %186 = vmatpush2.msra.mxu0 0.0
  %187 = vmatprep.subr.mxu0 0.0
  %188 = vmatpush2.msra.mxu0 0.0
  %189 = vmatprep.subr.mxu0 0.0
  %190 = vmatpush2.msra.mxu0 0.0
  %191 = vmatprep.subr.mxu0 0.0
  %192 = vmatpush2.msra.mxu0 0.0
  %193 = vmatprep.subr.mxu0 0.0
  %194 = vmatpush2.msra.mxu0 0.0
  %195 = vmatprep.subr.mxu0 0.0
  %196 = vmatpush2.msra.mxu0 0.0
  %197 = vmatprep.subr.mxu0 0.0
  %198 = vmatpush2.msra.mxu0 0.0
  %199 = vmatprep.subr.mxu0 0.0
  %200 = vmatpush2.msra.mxu0 0.0
  %201 = vmatprep.mubr.f32.mxu0 0.0
  %202 = vmatmul.mubr.f32.gmra.mxu0 %v135
  %v203 = vpop.f32.mrf.mxu0
  %v204 = vadd.f32 %v131, %v203
  %v205 = vpop.f32.mrf.mxu0
  %206 = vdwg.mxu0
  %v207 = vmax.f32 %v204, 0.0
  %v208 = vld [vmem:[%s5] sm:$0xff]
  %v209 = vld [vmem:[%s5 + $0x8] sm:$0xff]
  %v210 = vld [vmem:[%s5 + $0x10] sm:$0xff]
  %v211 = vld [vmem:[%s5 + $0x18] sm:$0xff]
  %v212 = vld [vmem:[%s5 + $0x20] sm:$0xff]
  %v213 = vld [vmem:[%s5 + $0x28] sm:$0xff]
  %v214 = vld [vmem:[%s5 + $0x30] sm:$0xff]
  %v215 = vld [vmem:[%s5 + $0x38] sm:$0xff]
  %v216 = vld [vmem:[%s5 + $0x40] sm:$0xff]
  %v217 = vld [vmem:[%s5 + $0x48] sm:$0xff]
  %v218 = vld [vmem:[%s5 + $0x50] sm:$0xff]
  %v219 = vld [vmem:[%s5 + $0x58] sm:$0xff]
  %v220 = vld [vmem:[%s5 + $0x60] sm:$0xff]
  %v221 = vld [vmem:[%s5 + $0x68] sm:$0xff]
  %v222 = vld [vmem:[%s5 + $0x70] sm:$0xff]
  %v223 = vld [vmem:[%s5 + $0x78] sm:$0xff]
  %224 = vmatprep.subr.mxu0 0.0
  %225 = vmatpush1.msra.mxu0 %v223
  %226 = vmatprep.subr.mxu0 0.0
  %227 = vmatpush1.msra.mxu0 %v222
  %228 = vmatprep.subr.mxu0 0.0
  %229 = vmatpush1.msra.mxu0 %v221
  %230 = vmatprep.subr.mxu0 0.0
  %231 = vmatpush1.msra.mxu0 %v220
  %232 = vmatprep.subr.mxu0 0.0
  %233 = vmatpush1.msra.mxu0 %v219
  %234 = vmatprep.subr.mxu0 0.0
  %235 = vmatpush1.msra.mxu0 %v218
  %236 = vmatprep.subr.mxu0 0.0
  %237 = vmatpush1.msra.mxu0 %v217
  %238 = vmatprep.subr.mxu0 0.0
  %239 = vmatpush1.msra.mxu0 %v216
  %240 = vmatprep.subr.mxu0 0.0
  %241 = vmatpush1.msra.mxu0 %v215
  %242 = vmatprep.subr.mxu0 0.0
  %243 = vmatpush1.msra.mxu0 %v214
  %244 = vmatprep.subr.mxu0 0.0
  %245 = vmatpush1.msra.mxu0 %v213
  %246 = vmatprep.subr.mxu0 0.0
  %247 = vmatpush1.msra.mxu0 %v212
  %248 = vmatprep.subr.mxu0 0.0
  %249 = vmatpush1.msra.mxu0 %v211
  %250 = vmatprep.subr.mxu0 0.0
  %251 = vmatpush1.msra.mxu0 %v210
  %252 = vmatprep.subr.mxu0 0.0
  %253 = vmatpush1.msra.mxu0 %v209
  %254 = vmatprep.subr.mxu0 0.0
  %255 = vmatpush1.msra.mxu0 %v208
  %256 = vmatprep.subr.mxu0 0.0
  %257 = vmatpush2.msra.mxu0 0.0
  %258 = vmatprep.subr.mxu0 0.0
  %259 = vmatpush2.msra.mxu0 0.0
  %260 = vmatprep.subr.mxu0 0.0
  %261 = vmatpush2.msra.mxu0 0.0
  %262 = vmatprep.subr.mxu0 0.0
  %263 = vmatpush2.msra.mxu0 0.0
  %264 = vmatprep.subr.mxu0 0.0
  %265 = vmatpush2.msra.mxu0 0.0
  %266 = vmatprep.subr.mxu0 0.0
  %267 = vmatpush2.msra.mxu0 0.0
  %268 = vmatprep.subr.mxu0 0.0
  %269 = vmatpush2.msra.mxu0 0.0
  %270 = vmatprep.subr.mxu0 0.0
  %271 = vmatpush2.msra.mxu0 0.0
  %272 = vmatprep.subr.mxu0 0.0
  %273 = vmatpush2.msra.mxu0 0.0
  %274 = vmatprep.subr.mxu0 0.0
  %275 = vmatpush2.msra.mxu0 0.0
  %276 = vmatprep.subr.mxu0 0.0
  %277 = vmatpush2.msra.mxu0 0.0
  %278 = vmatprep.subr.mxu0 0.0
  %279 = vmatpush2.msra.mxu0 0.0
  %280 = vmatprep.subr.mxu0 0.0
  %281 = vmatpush2.msra.mxu0 0.0
  %282 = vmatprep.subr.mxu0 0.0
  %283 = vmatpush2.msra.mxu0 0.0
  %284 = vmatprep.subr.mxu0 0.0
  %285 = vmatpush2.msra.mxu0 0.0
  %286 = vmatprep.subr.mxu0 0.0
  %287 = vmatpush2.msra.mxu0 0.0
  %288 = vmatprep.mubr.f32.mxu0 0.0
  %289 = vmatmul.mubr.f32.gmra.mxu0 %v207
  %v290 = vpop.f32.mrf.mxu0
  %v291 = vadd.f32 0.0, %v290
  %v292 = vpop.f32.mrf.mxu0
  %293 = vdwg.mxu0
  %v294 = vld [vmem:[%s6] sm:$0x1]
  %v296 = vlaneseq
  %v297 = vshrl.u32 %v296, 7
  %v298 = vsub.s32 0, %v297
  %v299 = vrot.slane %v294, %v298
  %301 = vmatprep.subr.mxu0 0.0
  %302 = vmatpush1.msra.mxu0 0.0
  %303 = vmatprep.subr.mxu0 0.0
  %304 = vmatpush1.msra.mxu0 0.0
  %305 = vmatprep.subr.mxu0 0.0
  %306 = vmatpush1.msra.mxu0 0.0
  %307 = vmatprep.subr.mxu0 0.0
  %308 = vmatpush1.msra.mxu0 0.0
  %309 = vmatprep.subr.mxu0 0.0
  %310 = vmatpush1.msra.mxu0 0.0
  %311 = vmatprep.subr.mxu0 0.0
  %312 = vmatpush1.msra.mxu0 0.0
  %313 = vmatprep.subr.mxu0 0.0
  %314 = vmatpush1.msra.mxu0 0.0
  %315 = vmatprep.subr.mxu0 0.0
  %316 = vmatpush1.msra.mxu0 0.0
  %317 = vmatprep.subr.mxu0 0.0
  %318 = vmatpush1.msra.mxu0 0.0
  %319 = vmatprep.subr.mxu0 0.0
  %320 = vmatpush1.msra.mxu0 0.0
  %321 = vmatprep.subr.mxu0 0.0
  %322 = vmatpush1.msra.mxu0 0.0
  %323 = vmatprep.subr.mxu0 0.0
  %324 = vmatpush1.msra.mxu0 0.0
  %325 = vmatprep.subr.mxu0 0.0
  %326 = vmatpush1.msra.mxu0 0.0
  %327 = vmatprep.subr.mxu0 0.0
  %328 = vmatpush1.msra.mxu0 0.0
  %329 = vmatprep.subr.mxu0 0.0
  %330 = vmatpush1.msra.mxu0 0.0
  %331 = vmatprep.subr.mxu0 0.0
  %332 = vmatpush1.msra.mxu0 %v291
  %333 = vmatprep.subr.mxu0 0.0
  %334 = vmatpush2.msra.mxu0 0.0
  %335 = vmatprep.subr.mxu0 0.0
  %336 = vmatpush2.msra.mxu0 0.0
  %337 = vmatprep.subr.mxu0 0.0
  %338 = vmatpush2.msra.mxu0 0.0
  %339 = vmatprep.subr.mxu0 0.0
  %340 = vmatpush2.msra.mxu0 0.0
  %341 = vmatprep.subr.mxu0 0.0
  %342 = vmatpush2.msra.mxu0 0.0
  %343 = vmatprep.subr.mxu0 0.0
  %344 = vmatpush2.msra.mxu0 0.0
  %345 = vmatprep.subr.mxu0 0.0
  %346 = vmatpush2.msra.mxu0 0.0
  %347 = vmatprep.subr.mxu0 0.0
  %348 = vmatpush2.msra.mxu0 0.0
  %349 = vmatprep.subr.mxu0 0.0
  %350 = vmatpush2.msra.mxu0 0.0
  %351 = vmatprep.subr.mxu0 0.0
  %352 = vmatpush2.msra.mxu0 0.0
  %353 = vmatprep.subr.mxu0 0.0
  %354 = vmatpush2.msra.mxu0 0.0
  %355 = vmatprep.subr.mxu0 0.0
  %356 = vmatpush2.msra.mxu0 0.0
  %357 = vmatprep.subr.mxu0 0.0
  %358 = vmatpush2.msra.mxu0 0.0
  %359 = vmatprep.subr.mxu0 0.0
  %360 = vmatpush2.msra.mxu0 0.0
  %361 = vmatprep.subr.mxu0 0.0
  %362 = vmatpush2.msra.mxu0 0.0
  %363 = vmatprep.subr.mxu0 0.0
  %364 = vmatpush2.msra.mxu0 0.0
  %365 = vmatprep.mubr.f32.mxu0 0.0
  %366 = vmatmul.mubr.f32.gmra.mxu0 %v135
  %v367 = vpop.f32.mrf.mxu0
  %v368 = vadd.f32 %v299, %v367
  %v369 = vpop.f32.mrf.mxu0
  %370 = vdwg.mxu0
  %v371 = vmax.f32 %v368, 0.0
  %v372 = vld [vmem:[%s7] sm:$0xff]
  %v373 = vld [vmem:[%s7 + $0x8] sm:$0xff]
  %v374 = vld [vmem:[%s7 + $0x10] sm:$0xff]
  %v375 = vld [vmem:[%s7 + $0x18] sm:$0xff]
  %v376 = vld [vmem:[%s7 + $0x20] sm:$0xff]
  %v377 = vld [vmem:[%s7 + $0x28] sm:$0xff]
  %v378 = vld [vmem:[%s7 + $0x30] sm:$0xff]
  %v379 = vld [vmem:[%s7 + $0x38] sm:$0xff]
  %v380 = vld [vmem:[%s7 + $0x40] sm:$0xff]
  %v381 = vld [vmem:[%s7 + $0x48] sm:$0xff]
  %v382 = vld [vmem:[%s7 + $0x50] sm:$0xff]
  %v383 = vld [vmem:[%s7 + $0x58] sm:$0xff]
  %v384 = vld [vmem:[%s7 + $0x60] sm:$0xff]
  %v385 = vld [vmem:[%s7 + $0x68] sm:$0xff]
  %v386 = vld [vmem:[%s7 + $0x70] sm:$0xff]
  %v387 = vld [vmem:[%s7 + $0x78] sm:$0xff]
  %388 = vmatprep.subr.mxu0 0.0
  %389 = vmatpush1.msra.mxu0 %v387
  %390 = vmatprep.subr.mxu0 0.0
  %391 = vmatpush1.msra.mxu0 %v386
  %392 = vmatprep.subr.mxu0 0.0
  %393 = vmatpush1.msra.mxu0 %v385
  %394 = vmatprep.subr.mxu0 0.0
  %395 = vmatpush1.msra.mxu0 %v384
  %396 = vmatprep.subr.mxu0 0.0
  %397 = vmatpush1.msra.mxu0 %v383
  %398 = vmatprep.subr.mxu0 0.0
  %399 = vmatpush1.msra.mxu0 %v382
  %400 = vmatprep.subr.mxu0 0.0
  %401 = vmatpush1.msra.mxu0 %v381
  %402 = vmatprep.subr.mxu0 0.0
  %403 = vmatpush1.msra.mxu0 %v380
  %404 = vmatprep.subr.mxu0 0.0
  %405 = vmatpush1.msra.mxu0 %v379
  %406 = vmatprep.subr.mxu0 0.0
  %407 = vmatpush1.msra.mxu0 %v378
  %408 = vmatprep.subr.mxu0 0.0
  %409 = vmatpush1.msra.mxu0 %v377
  %410 = vmatprep.subr.mxu0 0.0
  %411 = vmatpush1.msra.mxu0 %v376
  %412 = vmatprep.subr.mxu0 0.0
  %413 = vmatpush1.msra.mxu0 %v375
  %414 = vmatprep.subr.mxu0 0.0
  %415 = vmatpush1.msra.mxu0 %v374
  %416 = vmatprep.subr.mxu0 0.0
  %417 = vmatpush1.msra.mxu0 %v373
  %418 = vmatprep.subr.mxu0 0.0
  %419 = vmatpush1.msra.mxu0 %v372
  %420 = vmatprep.subr.mxu0 0.0
  %421 = vmatpush2.msra.mxu0 0.0
  %422 = vmatprep.subr.mxu0 0.0
  %423 = vmatpush2.msra.mxu0 0.0
  %424 = vmatprep.subr.mxu0 0.0
  %425 = vmatpush2.msra.mxu0 0.0
  %426 = vmatprep.subr.mxu0 0.0
  %427 = vmatpush2.msra.mxu0 0.0
  %428 = vmatprep.subr.mxu0 0.0
  %429 = vmatpush2.msra.mxu0 0.0
  %430 = vmatprep.subr.mxu0 0.0
  %431 = vmatpush2.msra.mxu0 0.0
  %432 = vmatprep.subr.mxu0 0.0
  %433 = vmatpush2.msra.mxu0 0.0
  %434 = vmatprep.subr.mxu0 0.0
  %435 = vmatpush2.msra.mxu0 0.0
  %436 = vmatprep.subr.mxu0 0.0
  %437 = vmatpush2.msra.mxu0 0.0
  %438 = vmatprep.subr.mxu0 0.0
  %439 = vmatpush2.msra.mxu0 0.0
  %440 = vmatprep.subr.mxu0 0.0
  %441 = vmatpush2.msra.mxu0 0.0
  %442 = vmatprep.subr.mxu0 0.0
  %443 = vmatpush2.msra.mxu0 0.0
  %444 = vmatprep.subr.mxu0 0.0
  %445 = vmatpush2.msra.mxu0 0.0
  %446 = vmatprep.subr.mxu0 0.0
  %447 = vmatpush2.msra.mxu0 0.0
  %448 = vmatprep.subr.mxu0 0.0
  %449 = vmatpush2.msra.mxu0 0.0
  %450 = vmatprep.subr.mxu0 0.0
  %451 = vmatpush2.msra.mxu0 0.0
  %452 = vmatprep.mubr.f32.mxu0 0.0
  %453 = vmatmul.mubr.f32.gmra.mxu0 %v371
  %v454 = vpop.f32.mrf.mxu0
  %v455 = vadd.f32 0.0, %v454
  %v456 = vpop.f32.mrf.mxu0
  %457 = vdwg.mxu0
  %v458 = vld [vmem:[%s8] sm:$0x1]
  %v460 = vlaneseq
  %v461 = vshrl.u32 %v460, 7
  %v462 = vsub.s32 0, %v461
  %v463 = vrot.slane %v458, %v462
  %465 = vmatprep.subr.mxu0 0.0
  %466 = vmatpush1.msra.mxu0 0.0
  %467 = vmatprep.subr.mxu0 0.0
  %468 = vmatpush1.msra.mxu0 0.0
  %469 = vmatprep.subr.mxu0 0.0
  %470 = vmatpush1.msra.mxu0 0.0
  %471 = vmatprep.subr.mxu0 0.0
  %472 = vmatpush1.msra.mxu0 0.0
  %473 = vmatprep.subr.mxu0 0.0
  %474 = vmatpush1.msra.mxu0 0.0
  %475 = vmatprep.subr.mxu0 0.0
  %476 = vmatpush1.msra.mxu0 0.0
  %477 = vmatprep.subr.mxu0 0.0
  %478 = vmatpush1.msra.mxu0 0.0
  %479 = vmatprep.subr.mxu0 0.0
  %480 = vmatpush1.msra.mxu0 0.0
  %481 = vmatprep.subr.mxu0 0.0
  %482 = vmatpush1.msra.mxu0 0.0
  %483 = vmatprep.subr.mxu0 0.0
  %484 = vmatpush1.msra.mxu0 0.0
  %485 = vmatprep.subr.mxu0 0.0
  %486 = vmatpush1.msra.mxu0 0.0
  %487 = vmatprep.subr.mxu0 0.0
  %488 = vmatpush1.msra.mxu0 0.0
  %489 = vmatprep.subr.mxu0 0.0
  %490 = vmatpush1.msra.mxu0 0.0
  %491 = vmatprep.subr.mxu0 0.0
  %492 = vmatpush1.msra.mxu0 0.0
  %493 = vmatprep.subr.mxu0 0.0
  %494 = vmatpush1.msra.mxu0 0.0
  %495 = vmatprep.subr.mxu0 0.0
  %496 = vmatpush1.msra.mxu0 %v455
  %497 = vmatprep.subr.mxu0 0.0
  %498 = vmatpush2.msra.mxu0 0.0
  %499 = vmatprep.subr.mxu0 0.0
  %500 = vmatpush2.msra.mxu0 0.0
  %501 = vmatprep.subr.mxu0 0.0
  %502 = vmatpush2.msra.mxu0 0.0
  %503 = vmatprep.subr.mxu0 0.0
  %504 = vmatpush2.msra.mxu0 0.0
  %505 = vmatprep.subr.mxu0 0.0
  %506 = vmatpush2.msra.mxu0 0.0
  %507 = vmatprep.subr.mxu0 0.0
  %508 = vmatpush2.msra.mxu0 0.0
  %509 = vmatprep.subr.mxu0 0.0
  %510 = vmatpush2.msra.mxu0 0.0
  %511 = vmatprep.subr.mxu0 0.0
  %512 = vmatpush2.msra.mxu0 0.0
  %513 = vmatprep.subr.mxu0 0.0
  %514 = vmatpush2.msra.mxu0 0.0
  %515 = vmatprep.subr.mxu0 0.0
  %516 = vmatpush2.msra.mxu0 0.0
  %517 = vmatprep.subr.mxu0 0.0
  %518 = vmatpush2.msra.mxu0 0.0
  %519 = vmatprep.subr.mxu0 0.0
  %520 = vmatpush2.msra.mxu0 0.0
  %521 = vmatprep.subr.mxu0 0.0
  %522 = vmatpush2.msra.mxu0 0.0
  %523 = vmatprep.subr.mxu0 0.0
  %524 = vmatpush2.msra.mxu0 0.0
  %525 = vmatprep.subr.mxu0 0.0
  %526 = vmatpush2.msra.mxu0 0.0
  %527 = vmatprep.subr.mxu0 0.0
  %528 = vmatpush2.msra.mxu0 0.0
  %529 = vmatprep.mubr.f32.mxu0 0.0
  %530 = vmatmul.mubr.f32.gmra.mxu0 %v135
  %v531 = vpop.f32.mrf.mxu0
  %v532 = vadd.f32 %v463, %v531
  %v533 = vpop.f32.mrf.mxu0
  %534 = vdwg.mxu0
  %v535 = vld [vmem:[%s1] sm:$0xff]
  %v537 = vsel %vm133, %v535, 0
  %539 = vmatprep.subr.mxu0 0.0
  %540 = vmatpush1.msra.mxu0 0.0
  %541 = vmatprep.subr.mxu0 0.0
  %542 = vmatpush1.msra.mxu0 0.0
  %543 = vmatprep.subr.mxu0 0.0
  %544 = vmatpush1.msra.mxu0 0.0
  %545 = vmatprep.subr.mxu0 0.0
  %546 = vmatpush1.msra.mxu0 0.0
  %547 = vmatprep.subr.mxu0 0.0
  %548 = vmatpush1.msra.mxu0 0.0
  %549 = vmatprep.subr.mxu0 0.0
  %550 = vmatpush1.msra.mxu0 0.0
  %551 = vmatprep.subr.mxu0 0.0
  %552 = vmatpush1.msra.mxu0 0.0
  %553 = vmatprep.subr.mxu0 0.0
  %554 = vmatpush1.msra.mxu0 0.0
  %555 = vmatprep.subr.mxu0 0.0
  %556 = vmatpush1.msra.mxu0 0.0
  %557 = vmatprep.subr.mxu0 0.0
  %558 = vmatpush1.msra.mxu0 0.0
  %559 = vmatprep.subr.mxu0 0.0
  %560 = vmatpush1.msra.mxu0 0.0
  %561 = vmatprep.subr.mxu0 0.0
  %562 = vmatpush1.msra.mxu0 0.0
  %563 = vmatprep.subr.mxu0 0.0
  %564 = vmatpush1.msra.mxu0 0.0
  %565 = vmatprep.subr.mxu0 0.0
  %566 = vmatpush1.msra.mxu0 0.0
  %567 = vmatprep.subr.mxu0 0.0
  %568 = vmatpush1.msra.mxu0 0.0
  %569 = vmatprep.subr.mxu0 0.0
  %570 = vmatpush1.msra.mxu0 %v532
  %571 = vmatprep.subr.mxu0 0.0
  %572 = vmatpush2.msra.mxu0 0.0
  %573 = vmatprep.subr.mxu0 0.0
  %574 = vmatpush2.msra.mxu0 0.0
  %575 = vmatprep.subr.mxu0 0.0
  %576 = vmatpush2.msra.mxu0 0.0
  %577 = vmatprep.subr.mxu0 0.0
  %578 = vmatpush2.msra.mxu0 0.0
  %579 = vmatprep.subr.mxu0 0.0
  %580 = vmatpush2.msra.mxu0 0.0
  %581 = vmatprep.subr.mxu0 0.0
  %582 = vmatpush2.msra.mxu0 0.0
  %583 = vmatprep.subr.mxu0 0.0
  %584 = vmatpush2.msra.mxu0 0.0
  %585 = vmatprep.subr.mxu0 0.0
  %586 = vmatpush2.msra.mxu0 0.0
  %587 = vmatprep.subr.mxu0 0.0
  %588 = vmatpush2.msra.mxu0 0.0
  %589 = vmatprep.subr.mxu0 0.0
  %590 = vmatpush2.msra.mxu0 0.0
  %591 = vmatprep.subr.mxu0 0.0
  %592 = vmatpush2.msra.mxu0 0.0
  %593 = vmatprep.subr.mxu0 0.0
  %594 = vmatpush2.msra.mxu0 0.0
  %595 = vmatprep.subr.mxu0 0.0
  %596 = vmatpush2.msra.mxu0 0.0
  %597 = vmatprep.subr.mxu0 0.0
  %598 = vmatpush2.msra.mxu0 0.0
  %599 = vmatprep.subr.mxu0 0.0
  %600 = vmatpush2.msra.mxu0 0.0
  %601 = vmatprep.subr.mxu0 0.0
  %602 = vmatpush2.msra.mxu0 0.0
  %603 = vmatprep.mubr.f32.mxu0 0.0
  %604 = vmatmul.mubr.f32.gmra.mxu0 %v537
  %v605 = vpop.f32.mrf.mxu0
  %v606 = vadd.f32 0.0, %v605
  %v607 = vpop.f32.mrf.mxu0
  %608 = vdwg.mxu0
  %v609 = vld [vmem:[%s9] sm:$0xff]
  %v610 = vld [vmem:[%s9 + $0x8] sm:$0xff]
  %v611 = vld [vmem:[%s9 + $0x10] sm:$0xff]
  %v612 = vld [vmem:[%s9 + $0x18] sm:$0xff]
  %v613 = vld [vmem:[%s9 + $0x20] sm:$0xff]
  %v614 = vld [vmem:[%s9 + $0x28] sm:$0xff]
  %v615 = vld [vmem:[%s9 + $0x30] sm:$0xff]
  %v616 = vld [vmem:[%s9 + $0x38] sm:$0xff]
  %v617 = vld [vmem:[%s9 + $0x40] sm:$0xff]
  %v618 = vld [vmem:[%s9 + $0x48] sm:$0xff]
  %v619 = vld [vmem:[%s9 + $0x50] sm:$0xff]
  %v620 = vld [vmem:[%s9 + $0x58] sm:$0xff]
  %v621 = vld [vmem:[%s9 + $0x60] sm:$0xff]
  %v622 = vld [vmem:[%s9 + $0x68] sm:$0xff]
  %v623 = vld [vmem:[%s9 + $0x70] sm:$0xff]
  %v624 = vld [vmem:[%s9 + $0x78] sm:$0xff]
  %v625 = vld [vmem:[%s10] sm:$0x1]
  %v627 = vlaneseq
  %v628 = vshrl.u32 %v627, 7
  %v629 = vsub.s32 0, %v628
  %v630 = vrot.slane %v625, %v629
  %632 = vmatprep.subr.mxu0 0.0
  %633 = vmatpush1.msra.mxu0 %v624
  %634 = vmatprep.subr.mxu0 0.0
  %635 = vmatpush1.msra.mxu0 %v623
  %636 = vmatprep.subr.mxu0 0.0
  %637 = vmatpush1.msra.mxu0 %v622
  %638 = vmatprep.subr.mxu0 0.0
  %639 = vmatpush1.msra.mxu0 %v621
  %640 = vmatprep.subr.mxu0 0.0
  %641 = vmatpush1.msra.mxu0 %v620
  %642 = vmatprep.subr.mxu0 0.0
  %643 = vmatpush1.msra.mxu0 %v619
  %644 = vmatprep.subr.mxu0 0.0
  %645 = vmatpush1.msra.mxu0 %v618
  %646 = vmatprep.subr.mxu0 0.0
  %647 = vmatpush1.msra.mxu0 %v617
  %648 = vmatprep.subr.mxu0 0.0
  %649 = vmatpush1.msra.mxu0 %v616
  %650 = vmatprep.subr.mxu0 0.0
  %651 = vmatpush1.msra.mxu0 %v615
  %652 = vmatprep.subr.mxu0 0.0
  %653 = vmatpush1.msra.mxu0 %v614
  %654 = vmatprep.subr.mxu0 0.0
  %655 = vmatpush1.msra.mxu0 %v613
  %656 = vmatprep.subr.mxu0 0.0
  %657 = vmatpush1.msra.mxu0 %v612
  %658 = vmatprep.subr.mxu0 0.0
  %659 = vmatpush1.msra.mxu0 %v611
  %660 = vmatprep.subr.mxu0 0.0
  %661 = vmatpush1.msra.mxu0 %v610
  %662 = vmatprep.subr.mxu0 0.0
  %663 = vmatpush1.msra.mxu0 %v609
  %664 = vmatprep.subr.mxu0 0.0
  %665 = vmatpush2.msra.mxu0 0.0
  %666 = vmatprep.subr.mxu0 0.0
  %667 = vmatpush2.msra.mxu0 0.0
  %668 = vmatprep.subr.mxu0 0.0
  %669 = vmatpush2.msra.mxu0 0.0
  %670 = vmatprep.subr.mxu0 0.0
  %671 = vmatpush2.msra.mxu0 0.0
  %672 = vmatprep.subr.mxu0 0.0
  %673 = vmatpush2.msra.mxu0 0.0
  %674 = vmatprep.subr.mxu0 0.0
  %675 = vmatpush2.msra.mxu0 0.0
  %676 = vmatprep.subr.mxu0 0.0
  %677 = vmatpush2.msra.mxu0 0.0
  %678 = vmatprep.subr.mxu0 0.0
  %679 = vmatpush2.msra.mxu0 0.0
  %680 = vmatprep.subr.mxu0 0.0
  %681 = vmatpush2.msra.mxu0 0.0
  %682 = vmatprep.subr.mxu0 0.0
  %683 = vmatpush2.msra.mxu0 0.0
  %684 = vmatprep.subr.mxu0 0.0
  %685 = vmatpush2.msra.mxu0 0.0
  %686 = vmatprep.subr.mxu0 0.0
  %687 = vmatpush2.msra.mxu0 0.0
  %688 = vmatprep.subr.mxu0 0.0
  %689 = vmatpush2.msra.mxu0 0.0
  %690 = vmatprep.subr.mxu0 0.0
  %691 = vmatpush2.msra.mxu0 0.0
  %692 = vmatprep.subr.mxu0 0.0
  %693 = vmatpush2.msra.mxu0 0.0
  %694 = vmatprep.subr.mxu0 0.0
  %695 = vmatpush2.msra.mxu0 0.0
  %696 = vmatprep.mubr.f32.mxu0 0.0
  %697 = vmatmul.mubr.f32.gmra.mxu0 %v606
  %v698 = vpop.f32.mrf.mxu0
  %v699 = vadd.f32 %v630, %v698
  %v700 = vpop.f32.mrf.mxu0
  %701 = vdwg.mxu0
  %702 = vst [vmem:[%s11] sm:$0xff] %v699
  // Predicated region
  $region46: #{gcn_recommender_forward.1} parent=0 // pred_check
    _
  $region47: #{gcn_recommender_forward.1} parent=0 // pred_check_branch
    %704 = sbr.rel (0) target = $region49
  $region48: #{gcn_recommender_forward.1} parent=0 // pred_region
    _
  $region49: #{gcn_recommender_forward.1} parent=0 // pred_fallthru
    _
  // Predicated region
  $region50: #{gcn_recommender_forward.1} parent=0 // pred_check
    _
  $region51: #{gcn_recommender_forward.1} parent=0 // pred_check_branch
    %706 = sbr.rel (0) target = $region53
  $region52: #{gcn_recommender_forward.1} parent=0 // pred_region
    _
  $region53: #{gcn_recommender_forward.1} parent=0 // pred_fallthru
    _

</llo_original>
